<compile_context>
chip_gen: v7x
topology: tpu7x:2x2x1
jax: 0.10.0
libtpu: 0.0.40
codegen_flags: <defaults>
</compile_context>

<pallas_src>
import functools
import math

import jax
import jax.numpy as jnp
from jax import lax
from jax.experimental import pallas as pl
from jax.experimental.pallas import tpu as pltpu

_MASK_VALUE = -1e30            # large-negative instead of -inf; the diagonal is
                               # never masked, so the softmax denom stays > 0.
_VMEM_BUDGET = 40 * 1024 * 1024   # sized against v7x (64 MiB phys), with headroom
_TARGET_ROWS = 512                # rows/step near the measured HBM-roofline knee


def _cdiv(a, b):
    return -(-a // b)


def _vmem_bytes_per_step(bb, S, H, d_k):
    """Rough per-grid-step VMEM estimate (all f32)."""
    f32 = 4
    x_blk = 2 * bb * S * H * f32          # input block (double-buffered)
    o_blk = 2 * bb * S * d_k * f32        # output block (double-buffered)
    wgt = (H + 1) * 3 * d_k * f32         # fused W/b (single copy, unblocked VMEM)
    qkv = 2 * bb * S * 3 * d_k * f32      # projection result + k/q/v
    scores = 3 * bb * S * S * f32         # scores / exp / softmax temporaries
    return x_blk + o_blk + wgt + qkv + scores


def _choose_batch_block(B, S, H, d_k):
    bb = max(1, min(B, _cdiv(_TARGET_ROWS, S)))
    while bb > 1 and _vmem_bytes_per_step(bb, S, H, d_k) > _VMEM_BUDGET:
        bb -= 1
    return bb


def _attention_kernel(x_ref, wqkv_ref, bqkv_ref, o_ref, *, matmul_dtype,
                      approx_recip):
    # x_ref: (Bb, S, H); wqkv_ref: (H, 3*d_k); bqkv_ref: (1, 3*d_k)
    # o_ref: (Bb, S, d_k)
    Bb, S, H = x_ref.shape
    d_k = wqkv_ref.shape[1] // 3

    # Single fused QKV projection on (Bb*S, H) rows: one MXU push with N=3*d_k.
    # Optionally cast the *operands only* to bf16 (MXU-native on v5e/v6e/v7x);
    # accumulation and everything downstream stays f32.
    x2d = x_ref[...].reshape(Bb * S, H)
    w2d = wqkv_ref[...]
    if matmul_dtype != jnp.float32:
        x2d = x2d.astype(matmul_dtype)
        w2d = w2d.astype(matmul_dtype)
    qkv = jnp.dot(x2d, w2d, preferred_element_type=jnp.float32)
    qkv = qkv + bqkv_ref[...]                          # single fused bias add

    # Slice in 2-D, then split only the leading dim (no lane relayout).  The
    # d_k-offset lane slices are 128-aligned only when d_k % 128 == 0; at
    # d_k=8 all three projections live inside one vreg (cheap lane select).
    k = qkv[:, 0 * d_k:1 * d_k].reshape(Bb, S, d_k)
    q = qkv[:, 1 * d_k:2 * d_k].reshape(Bb, S, d_k)
    v = qkv[:, 2 * d_k:3 * d_k].reshape(Bb, S, d_k)

    # weight = floor((k @ q^T) / sqrt(d_k)); batched contraction over the last
    # dims (no explicit transpose / XLU pass).  True divide (not mul by the
    # reciprocal) to match torch's float floor-division exactly.
    s = jnp.einsum('bid,bjd->bij', k, q, preferred_element_type=jnp.float32)
    s = jnp.floor(s / math.sqrt(d_k))

    # strict upper-triangular causal mask (pure VPU).
    rows = lax.broadcasted_iota(jnp.int32, (S, S), 0)
    cols = lax.broadcasted_iota(jnp.int32, (S, S), 1)
    s = jnp.where((cols > rows)[None, :, :], _MASK_VALUE, s)

    # softmax over the last dim.
    s_max = jnp.max(s, axis=-1, keepdims=True)
    e = jnp.exp(s - s_max)
    denom = jnp.sum(e, axis=-1, keepdims=True)
    if approx_recip:
        score = e * pl.reciprocal(denom, approx=True)   # EUP slot, ~1e-4 rel
    else:
        score = e / denom

    out = jnp.einsum('bij,bjd->bid', score, v, preferred_element_type=jnp.float32)
    o_ref[...] = out.astype(o_ref.dtype)

    # TODO(synk): replace the dense (Bb,S,S) score with a KV-tiled online-softmax
    # (flash) accumulator for realistic S (>= ~1k), sized for v7x's 64 MiB VMEM.


def single_attention(x, wk, bk, wq, bq, wv, bv, *, batch_block=None,
                     matmul_dtype=jnp.float32, approx_softmax_reciprocal=True):
    """Pallas-TPU SingleAttention.forward.

    x: (B, S, H) f32; w*: (H, d_k) (nn.Linear weights pre-transposed);
    b*: (1, d_k).  Returns (B, S, d_k) f32.
    """
    B, S, H = x.shape
    d_k = wk.shape[1]

    # Fuse the three projections into one weight / bias (tiny one-off concat;
    # a real model would store the parameters fused).
    wqkv = jnp.concatenate([wk, wq, wv], axis=1)   # (H, 3*d_k)
    bqkv = jnp.concatenate([bk, bq, bv], axis=1)   # (1, 3*d_k)

    if batch_block is None:
        batch_block = _choose_batch_block(B, S, H, d_k)
    batch_block = max(1, min(batch_block, B))

    # Pad B up to a multiple of batch_block (every step stays full-sized),
    # slice the result back -- instead of shrinking batch_block for awkward B.
    num_steps = _cdiv(B, batch_block)
    B_pad = num_steps * batch_block
    x_in = x if B_pad == B else jnp.pad(x, ((0, B_pad - B), (0, 0), (0, 0)))

    # Only raise the scoped-VMEM limit when the estimate needs it; cap at
    # 48 MiB so the same setting stays inside v7x's 64 MiB physical VMEM.
    est = _vmem_bytes_per_step(batch_block, S, H, d_k)
    vmem_limit = None
    if est > 12 * 1024 * 1024:
        vmem_limit = min(48 * 1024 * 1024, max(2 * est, 32 * 1024 * 1024))

    kernel = functools.partial(_attention_kernel, matmul_dtype=matmul_dtype,
                               approx_recip=approx_softmax_reciprocal)

    out = pl.pallas_call(
        kernel,
        out_shape=jax.ShapeDtypeStruct((B_pad, S, d_k), jnp.float32),
        grid_spec=pltpu.PrefetchScalarGridSpec(
            num_scalar_prefetch=0,
            grid=(num_steps,),
            in_specs=[
                # x: pipelined, double-buffered batch blocks.
                pl.BlockSpec((batch_block, S, H), lambda b: (b, 0, 0)),
                # fused weights / bias: whole-array, resident in VMEM once
                # (grid-invariant -> no double-buffering, no per-step DMA).
                pl.BlockSpec(memory_space=pltpu.MemorySpace.VMEM),
                pl.BlockSpec(memory_space=pltpu.MemorySpace.VMEM),
            ],
            # NOTE: d_k < 128 -> masked partial stores; unavoidable for this
            # single-head module (total output here is only 512 B).
            out_specs=pl.BlockSpec((batch_block, S, d_k), lambda b: (b, 0, 0)),
        ),
        compiler_params=pltpu.CompilerParams(
            dimension_semantics=("parallel",),
            vmem_limit_bytes=vmem_limit),
    )(x_in, wqkv, bqkv)

    return out if B_pad == B else out[:B]


def _reference(x, wk, bk, wq, bq, wv, bv):
    d_k = wk.shape[1]
    k = jnp.einsum('bsh,hd->bsd', x, wk) + bk[0]
    q = jnp.einsum('bsh,hd->bsd', x, wq) + bq[0]
    v = jnp.einsum('bsh,hd->bsd', x, wv) + bv[0]
    w = jnp.floor(jnp.einsum('bsd,btd->bst', k, q) / math.sqrt(d_k))
    s = x.shape[1]
    mask = jnp.triu(jnp.ones((s, s), dtype=bool), k=1)
    w = jnp.where(mask[None], -jnp.inf, w)
    score = jax.nn.softmax(w, axis=-1)
    return jnp.einsum('bst,btd->bsd', score, v)


if __name__ == "__main__":
    # Small shapes consistent with the module: batch=2, seq=8, hidden=32, heads=4
    B, S, H, num_head = 2, 8, 32, 4
    d_k = H // num_head

    key = jax.random.PRNGKey(0)
    kx, kwk, kbk, kwq, kbq, kwv, kbv = jax.random.split(key, 7)

    x = jax.random.normal(kx, (B, S, H), dtype=jnp.float32)

    # Deterministic synthetic parameters (nn.Linear(H, d_k) weights stored
    # pre-transposed as (H, d_k)).
    bound = 1.0 / math.sqrt(H)
    wk = jax.random.uniform(kwk, (H, d_k), jnp.float32, -bound, bound)
    bk = jax.random.uniform(kbk, (1, d_k), jnp.float32, -bound, bound)
    wq = jax.random.uniform(kwq, (H, d_k), jnp.float32, -bound, bound)
    bq = jax.random.uniform(kbq, (1, d_k), jnp.float32, -bound, bound)
    wv = jax.random.uniform(kwv, (H, d_k), jnp.float32, -bound, bound)
    bv = jax.random.uniform(kbv, (1, d_k), jnp.float32, -bound, bound)

    # 1) Default path: batch_block == B -> single grid step, approx EUP recip.
    out = jax.block_until_ready(single_attention(x, wk, bk, wq, bq, wv, bv))
    ref = _reference(x, wk, bk, wq, bq, wv, bv)
    assert out.shape == (B, S, d_k)
    assert jnp.allclose(out, ref, atol=1e-3, rtol=1e-3), (
        f"default path: max abs err {float(jnp.max(jnp.abs(out - ref)))}")

    # 2) Ragged-batch path: B=3 with batch_block=2 -> padded to 4, 2 grid
    #    steps, exact (non-approx) softmax reciprocal.
    x3 = jax.random.normal(jax.random.PRNGKey(1), (3, S, H), dtype=jnp.float32)
    out3 = jax.block_until_ready(
        single_attention(x3, wk, bk, wq, bq, wv, bv, batch_block=2,
                         approx_softmax_reciprocal=False))
    ref3 = _reference(x3, wk, bk, wq, bq, wv, bv)
    assert out3.shape == (3, S, d_k)
    assert jnp.allclose(out3, ref3, atol=1e-3, rtol=1e-3), (
        f"padded path: max abs err {float(jnp.max(jnp.abs(out3 - ref3)))}")

    # 3) bf16-operand projection path (MXU-native on v5e/v6e/v7x).  floor() on
    #    the scores is boundary-fragile, so only sanity-check this variant.
    out_bf16 = jax.block_until_ready(
        single_attention(x, wk, bk, wq, bq, wv, bv, matmul_dtype=jnp.bfloat16))
    assert out_bf16.shape == (B, S, d_k)
    assert bool(jnp.all(jnp.isfinite(out_bf16)))

    print("KERNEL_OK")
</pallas_src>

<mosaic_0001>
module attributes {stable_mosaic.version = 11 : i64} {
  func.func @_attention_kernel(%arg0: i32, %arg1: memref<2x8x32xf32, #tpu.memory_space<vmem>>, %arg2: memref<32x24xf32, #tpu.memory_space<vmem>>, %arg3: memref<1x24xf32, #tpu.memory_space<vmem>>, %arg4: memref<2x8x8xf32, #tpu.memory_space<vmem>>) attributes {dimension_semantics = [#tpu.dimension_semantics<parallel>], iteration_bounds = array<i64: 1>, scalar_prefetch = 0 : i64, scratch_operands = 0 : i64, tpu.core_type = #tpu.core_type<tc>, window_params = [{transform_indices = @transform_0, window_bounds = array<i64: 2, 8, 32>}, {pipeline_mode = #tpu.pipeline_mode<synchronous>, transform_indices = @transform_1, window_bounds = array<i64: 32, 24>}, {pipeline_mode = #tpu.pipeline_mode<synchronous>, transform_indices = @transform_2, window_bounds = array<i64: 1, 24>}, {transform_indices = @transform_3, window_bounds = array<i64: 2, 8, 8>}]} {
    %c0 = arith.constant 0 : index
    %c0_0 = arith.constant 0 : index
    %c0_1 = arith.constant 0 : index
    %0 = vector.load %arg1[%c0, %c0_0, %c0_1] : memref<2x8x32xf32, #tpu.memory_space<vmem>>, vector<2x8x32xf32>
    %1 = vector.shape_cast %0 : vector<2x8x32xf32> to vector<16x32xf32>
    %c0_2 = arith.constant 0 : index
    %c0_3 = arith.constant 0 : index
    %2 = vector.load %arg2[%c0_2, %c0_3] : memref<32x24xf32, #tpu.memory_space<vmem>>, vector<32x24xf32>
    %cst = arith.constant dense<0.000000e+00> : vector<16x24xf32>
    %3 = tpu.matmul %1, %2, %cst {dimension_numbers = #tpu.dot_dimension_numbers<[1], [0], [0], [1], [0, 0, 1, 1], [], []>} : vector<16x32xf32>, vector<32x24xf32>, vector<16x24xf32> -> vector<16x24xf32>
    %c0_4 = arith.constant 0 : index
    %c0_5 = arith.constant 0 : index
    %4 = vector.load %arg3[%c0_4, %c0_5] : memref<1x24xf32, #tpu.memory_space<vmem>>, vector<1x24xf32>
    %5 = vector.broadcast %4 : vector<1x24xf32> to vector<16x24xf32>
    %6 = arith.addf %3, %5 : vector<16x24xf32>
    %7 = vector.extract_strided_slice %6 {offsets = [0, 0], sizes = [16, 8], strides = [1, 1]} : vector<16x24xf32> to vector<16x8xf32>
    %8 = vector.shape_cast %7 : vector<16x8xf32> to vector<2x8x8xf32>
    %9 = vector.extract_strided_slice %6 {offsets = [0, 8], sizes = [16, 8], strides = [1, 1]} : vector<16x24xf32> to vector<16x8xf32>
    %10 = vector.shape_cast %9 : vector<16x8xf32> to vector<2x8x8xf32>
    %11 = vector.extract_strided_slice %6 {offsets = [0, 16], sizes = [16, 8], strides = [1, 1]} : vector<16x24xf32> to vector<16x8xf32>
    %12 = vector.shape_cast %11 : vector<16x8xf32> to vector<2x8x8xf32>
    "tpu.trace_start"() <{level = 10 : i32, message = "bid,bjd->bij"}> : () -> ()
    %cst_6 = arith.constant dense<0.000000e+00> : vector<2x8x8xf32>
    %13 = tpu.matmul %8, %10, %cst_6 {dimension_numbers = #tpu.dot_dimension_numbers<[2], [2], [1], [1], [0, 0, 0, 1, 1, 1], [0], [0]>} : vector<2x8x8xf32>, vector<2x8x8xf32>, vector<2x8x8xf32> -> vector<2x8x8xf32>
    "tpu.trace_stop"() : () -> ()
    %cst_7 = arith.constant 2.82842708 : f32
    %14 = vector.broadcast %cst_7 : f32 to vector<2x8x8xf32>
    %15 = arith.divf %13, %14 : vector<2x8x8xf32>
    %16 = math.floor %15 : vector<2x8x8xf32>
    %17 = tpu.iota {dimensions = array<i32: 0>} : vector<8x8xi32>
    %18 = tpu.iota {dimensions = array<i32: 1>} : vector<8x8xi32>
    %19 = arith.cmpi sgt, %18, %17 : vector<8x8xi32>
    %20 = vector.shape_cast %19 : vector<8x8xi1> to vector<1x8x8xi1>
    %cst_8 = arith.constant -1.000000e+30 : f32
    %21 = vector.shape_cast %20 : vector<1x8x8xi1> to vector<1x8x8xi1>
    %22 = vector.broadcast %21 : vector<1x8x8xi1> to vector<2x8x8xi1>
    %23 = vector.broadcast %cst_8 : f32 to vector<2x8x8xf32>
    %24 = arith.select %22, %23, %16 : vector<2x8x8xi1>, vector<2x8x8xf32>
    %cst_9 = arith.constant dense<0xFF800000> : vector<2x8xf32>
    %25 = vector.multi_reduction <maximumf>, %24, %cst_9 [2] : vector<2x8x8xf32> to vector<2x8xf32>
    %26 = vector.shape_cast %25 : vector<2x8xf32> to vector<2x8x1xf32>
    %27 = vector.broadcast %26 : vector<2x8x1xf32> to vector<2x8x8xf32>
    %28 = arith.subf %24, %27 : vector<2x8x8xf32>
    %29 = math.exp %28 : vector<2x8x8xf32>
    %cst_10 = arith.constant dense<0.000000e+00> : vector<2x8xf32>
    %30 = vector.multi_reduction <add>, %29, %cst_10 [2] : vector<2x8x8xf32> to vector<2x8xf32>
    %31 = vector.shape_cast %30 : vector<2x8xf32> to vector<2x8x1xf32>
    %32 = tpu.reciprocal %31 {approx = true} : vector<2x8x1xf32> -> vector<2x8x1xf32>
    %33 = vector.broadcast %32 : vector<2x8x1xf32> to vector<2x8x8xf32>
    %34 = arith.mulf %29, %33 : vector<2x8x8xf32>
    "tpu.trace_start"() <{level = 10 : i32, message = "bij,bjd->bid"}> : () -> ()
    %cst_11 = arith.constant dense<0.000000e+00> : vector<2x8x8xf32>
    %35 = tpu.matmul %34, %12, %cst_11 {dimension_numbers = #tpu.dot_dimension_numbers<[2], [1], [1], [2], [0, 0, 0, 1, 1, 2], [0], [0]>} : vector<2x8x8xf32>, vector<2x8x8xf32>, vector<2x8x8xf32> -> vector<2x8x8xf32>
    "tpu.trace_stop"() : () -> ()
    %c0_12 = arith.constant 0 : index
    %c0_13 = arith.constant 0 : index
    %c0_14 = arith.constant 0 : index
    %36 = vector.load %arg4[%c0_12, %c0_13, %c0_14] : memref<2x8x8xf32, #tpu.memory_space<vmem>>, vector<2x8x8xf32>
    tpu.vector_store %arg4[%c0_12, %c0_13, %c0_14], %35 {strides = array<i32>} : memref<2x8x8xf32, #tpu.memory_space<vmem>>, vector<2x8x8xf32>,
    return
  }
  func.func @transform_0(%arg0: i32) -> (i32, i32, i32) {
    %c0_i32 = arith.constant 0 : i32
    %c0_i32_0 = arith.constant 0 : i32
    %c0_i32_1 = arith.constant 0 : i32
    return %arg0, %c0_i32, %c0_i32_0 : i32, i32, i32
  }
  func.func @transform_1(%arg0: i32) -> (i32, i32) {
    %c0_i32 = arith.constant 0 : i32
    %c0_i32_0 = arith.constant 0 : i32
    %c0_i32_1 = arith.constant 0 : i32
    return %c0_i32, %c0_i32_0 : i32, i32
  }
  func.func @transform_2(%arg0: i32) -> (i32, i32) {
    %c0_i32 = arith.constant 0 : i32
    %c0_i32_0 = arith.constant 0 : i32
    %c0_i32_1 = arith.constant 0 : i32
    return %c0_i32, %c0_i32_0 : i32, i32
  }
  func.func @transform_3(%arg0: i32) -> (i32, i32, i32) {
    %c0_i32 = arith.constant 0 : i32
    %c0_i32_0 = arith.constant 0 : i32
    %c0_i32_1 = arith.constant 0 : i32
    return %arg0, %c0_i32, %c0_i32_0 : i32, i32, i32
  }
}

</mosaic_0001>

<llo_original>
// kernel: tpu_custom_call.1
$region0: #{tpu_custom_call.1}
  #allocation0 [shape = 'u32[]', space=smem, size = 0x4, offset = 0x4, fixed_abs, tag = 'smem constant byte address 0x4 - core index']
  #allocation1 [shape = 'u32[144,128]{1,0:T(1,128)}', space=vmem, size = 0x12000, scoped, tag = 'internal scratch']
  %s0 = inlined_call_operand.vmem [shape: f32[2,8,32], index: 0, kind: input, shape index: {}]
  %s1 = inlined_call_operand.vmem [shape: f32[32,24], index: 1, kind: input, shape index: {}]
  %s2 = inlined_call_operand.vmem [shape: f32[1,24], index: 2, kind: input, shape index: {}]
  %s3 = inlined_call_operand.hbm [shape: f32[2,8,8], index: 3, kind: output, shape index: {}]
  %s4 = sld [smem:[#allocation0]]
  $region22: #{tpu_custom_call.1} parent=0
    _
  %s6 = ssub.s32 1, %s4
  %s7 = scalar_select 0, %s6, %s4
  $region1: #{tpu_custom_call.1} parent=0
    #allocation2 [shape = 'u8[8192]{0}', space=vmem, size = 0x2000, scoped, tag = 'output window, operand 0, single buffered']
    #allocation3 [shape = 's32[1]{0}', space=sflag, size = 0x4, scoped, tag = 'scoped memory for tpu_custom_call.1']
    %8 = vsyncpa [#allocation3], 0
    // Predicated region
    $region2: #{tpu_custom_call.1} parent=1 // pred_check
      _
    $region3: #{tpu_custom_call.1} parent=1 // pred_check_branch
      %10 = sbr.rel (0) target = $region5
    $region4: #{tpu_custom_call.1} parent=1 // pred_region
      _
    $region5: #{tpu_custom_call.1} parent=1 // pred_fallthru
      _
    // Predicated region
    $region6: #{tpu_custom_call.1} parent=1 // pred_check
      _
    $region7: #{tpu_custom_call.1} parent=1 // pred_check_branch
      %12 = sbr.rel (0) target = $region9
    $region8: #{tpu_custom_call.1} parent=1 // pred_region
      _
    $region9: #{tpu_custom_call.1} parent=1 // pred_fallthru
      _
    // Predicated region
    $region10: #{tpu_custom_call.1} parent=1 // pred_check
      _
    $region11: #{tpu_custom_call.1} parent=1 // pred_check_branch
      %14 = sbr.rel (0) target = $region13
    $region12: #{tpu_custom_call.1} parent=1 // pred_region
      _
    $region13: #{tpu_custom_call.1} parent=1 // pred_fallthru
      _
    %v15 = vld [vmem:[%s0] sm:$0xff]
    %v16 = vld [vmem:[%s0 + $0x8] sm:$0xff]
    %v17 = vld [vmem:[%s1] sm:$0xff]
    %v18 = vld [vmem:[%s1 + $0x8] sm:$0xff]
    %v19 = vld [vmem:[%s1 + $0x10] sm:$0xff]
    %v20 = vld [vmem:[%s1 + $0x18] sm:$0xff]
    %v21 = vld [vmem:[%s2] sm:$0x1]
    %v23 = vlaneseq
    %v24 = vshrl.u32 %v23, 7
    %v25 = vsub.s32 0, %v24
    %v26 = vrot.slane %v21, %v25
    %vm28 = vcmask 261120
    %v30 = vsel %vm28, %v15, 0
    %v33 = vsel %vm28, %v16, 0
    %35 = vmatprep.subr.mxu0 0.0
    %36 = vmatpush1.msra.mxu0 %v17
    %37 = vmatprep.subr.mxu0 0.0
    %38 = vmatpush1.msra.mxu0 %v18
    %39 = vmatprep.subr.mxu0 0.0
    %40 = vmatpush1.msra.mxu0 %v19
    %41 = vmatprep.subr.mxu0 0.0
    %42 = vmatpush1.msra.mxu0 %v20
    %43 = vmatprep.subr.mxu0 0.0
    %44 = vmatpush1.msra.mxu0 0.0
    %45 = vmatprep.subr.mxu0 0.0
    %46 = vmatpush1.msra.mxu0 0.0
    %47 = vmatprep.subr.mxu0 0.0
    %48 = vmatpush1.msra.mxu0 0.0
    %49 = vmatprep.subr.mxu0 0.0
    %50 = vmatpush1.msra.mxu0 0.0
    %51 = vmatprep.subr.mxu0 0.0
    %52 = vmatpush1.msra.mxu0 0.0
    %53 = vmatprep.subr.mxu0 0.0
    %54 = vmatpush1.msra.mxu0 0.0
    %55 = vmatprep.subr.mxu0 0.0
    %56 = vmatpush1.msra.mxu0 0.0
    %57 = vmatprep.subr.mxu0 0.0
    %58 = vmatpush1.msra.mxu0 0.0
    %59 = vmatprep.subr.mxu0 0.0
    %60 = vmatpush1.msra.mxu0 0.0
    %61 = vmatprep.subr.mxu0 0.0
    %62 = vmatpush1.msra.mxu0 0.0
    %63 = vmatprep.subr.mxu0 0.0
    %64 = vmatpush1.msra.mxu0 0.0
    %65 = vmatprep.subr.mxu0 0.0
    %66 = vmatpush1.msra.mxu0 0.0
    %67 = vmatprep.subr.mxu0 0.0
    %68 = vmatpush1.msra.mxu0 0.0
    %69 = vmatprep.subr.mxu0 0.0
    %70 = vmatpush1.msra.mxu0 0.0
    %71 = vmatprep.subr.mxu0 0.0
    %72 = vmatpush1.msra.mxu0 0.0
    %73 = vmatprep.subr.mxu0 0.0
    %74 = vmatpush1.msra.mxu0 0.0
    %75 = vmatprep.subr.mxu0 0.0
    %76 = vmatpush1.msra.mxu0 0.0
    %77 = vmatprep.subr.mxu0 0.0
    %78 = vmatpush1.msra.mxu0 0.0
    %79 = vmatprep.subr.mxu0 0.0
    %80 = vmatpush1.msra.mxu0 0.0
    %81 = vmatprep.subr.mxu0 0.0
    %82 = vmatpush1.msra.mxu0 0.0
    %83 = vmatprep.subr.mxu0 0.0
    %84 = vmatpush1.msra.mxu0 0.0
    %85 = vmatprep.subr.mxu0 0.0
    %86 = vmatpush1.msra.mxu0 0.0
    %87 = vmatprep.subr.mxu0 0.0
    %88 = vmatpush1.msra.mxu0 0.0
    %89 = vmatprep.subr.mxu0 0.0
    %90 = vmatpush1.msra.mxu0 0.0
    %91 = vmatprep.subr.mxu0 0.0
    %92 = vmatpush1.msra.mxu0 0.0
    %93 = vmatprep.subr.mxu0 0.0
    %94 = vmatpush1.msra.mxu0 0.0
    %95 = vmatprep.subr.mxu0 0.0
    %96 = vmatpush1.msra.mxu0 0.0
    %97 = vmatprep.subr.mxu0 0.0
    %98 = vmatpush1.msra.mxu0 0.0
    %99 = vmatprep.mubr.f32.mxu0 0.0
    %100 = vmatmul.mubr.f32.gmra.mrb[0].mxu0 %v30
    %v101 = vpop.f32.mrb[0].mxu0
    %v102 = vadd.f32 %v26, %v101
    %v103 = vpop.f32.mrb[0].mxu0
    %104 = vmatprep.mubr.f32.mxu0 0.0
    %105 = vmatmul.mubr.f32.gmra.mrb[0].mxu0 %v33
    %v106 = vpop.f32.mrb[0].mxu0
    %v107 = vadd.f32 %v26, %v106
    %v108 = vpop.f32.mrb[0].mxu0
    %109 = vdwg.mxu0
    %111 = vrot.lane.b32.xlu0 %v102, 120
    %v112 = vpop.permute.xlu0 %111
    %vm113 = vcmask 64512
    %v114 = vsel %vm113, %v102, 0
    %v116 = vsel %vm113, %v112, 0
    %118 = vmatprep.subr.mxu0 0.0
    %119 = vmatpush1.xpose.msra.mxu0 %v116
    %120 = vmatprep.subr.mxu0 0.0
    %121 = vmatpush1.xpose.msra.mxu0 0.0
    %122 = vmatprep.subr.mxu0 0.0
    %123 = vmatpush1.xpose.msra.mxu0 0.0
    %124 = vmatprep.subr.mxu0 0.0
    %125 = vmatpush1.xpose.msra.mxu0 0.0
    %126 = vmatprep.subr.mxu0 0.0
    %127 = vmatpush1.xpose.msra.mxu0 0.0
    %128 = vmatprep.subr.mxu0 0.0
    %129 = vmatpush1.xpose.msra.mxu0 0.0
    %130 = vmatprep.subr.mxu0 0.0
    %131 = vmatpush1.xpose.msra.mxu0 0.0
    %132 = vmatprep.subr.mxu0 0.0
    %133 = vmatpush1.xpose.msra.mxu0 0.0
    %134 = vmatprep.subr.mxu0 0.0
    %135 = vmatpush1.xpose.msra.mxu0 0.0
    %136 = vmatprep.subr.mxu0 0.0
    %137 = vmatpush1.xpose.msra.mxu0 0.0
    %138 = vmatprep.subr.mxu0 0.0
    %139 = vmatpush1.xpose.msra.mxu0 0.0
    %140 = vmatprep.subr.mxu0 0.0
    %141 = vmatpush1.xpose.msra.mxu0 0.0
    %142 = vmatprep.subr.mxu0 0.0
    %143 = vmatpush1.xpose.msra.mxu0 0.0
    %144 = vmatprep.subr.mxu0 0.0
    %145 = vmatpush1.xpose.msra.mxu0 0.0
    %146 = vmatprep.subr.mxu0 0.0
    %147 = vmatpush1.xpose.msra.mxu0 0.0
    %148 = vmatprep.subr.mxu0 0.0
    %149 = vmatpush1.xpose.msra.mxu0 0.0
    %150 = vmatprep.subr.mxu0 0.0
    %151 = vmatpush1.xpose.msra.mxu0 0.0
    %152 = vmatprep.subr.mxu0 0.0
    %153 = vmatpush1.xpose.msra.mxu0 0.0
    %154 = vmatprep.subr.mxu0 0.0
    %155 = vmatpush1.xpose.msra.mxu0 0.0
    %156 = vmatprep.subr.mxu0 0.0
    %157 = vmatpush1.xpose.msra.mxu0 0.0
    %158 = vmatprep.subr.mxu0 0.0
    %159 = vmatpush1.xpose.msra.mxu0 0.0
    %160 = vmatprep.subr.mxu0 0.0
    %161 = vmatpush1.xpose.msra.mxu0 0.0
    %162 = vmatprep.subr.mxu0 0.0
    %163 = vmatpush1.xpose.msra.mxu0 0.0
    %164 = vmatprep.subr.mxu0 0.0
    %165 = vmatpush1.xpose.msra.mxu0 0.0
    %166 = vmatprep.subr.mxu0 0.0
    %167 = vmatpush1.xpose.msra.mxu0 0.0
    %168 = vmatprep.subr.mxu0 0.0
    %169 = vmatpush1.xpose.msra.mxu0 0.0
    %170 = vmatprep.subr.mxu0 0.0
    %171 = vmatpush1.xpose.msra.mxu0 0.0
    %172 = vmatprep.subr.mxu0 0.0
    %173 = vmatpush1.xpose.msra.mxu0 0.0
    %174 = vmatprep.subr.mxu0 0.0
    %175 = vmatpush1.xpose.msra.mxu0 0.0
    %176 = vmatprep.subr.mxu0 0.0
    %177 = vmatpush1.xpose.msra.mxu0 0.0
    %178 = vmatprep.subr.mxu0 0.0
    %179 = vmatpush1.xpose.msra.mxu0 0.0
    %180 = vmatprep.subr.mxu0 0.0
    %181 = vmatpush1.xpose.msra.mxu0 0.0
    %182 = vmatprep.mubr.f32.mxu0 0.0
    %183 = vmatmul.mubr.f32.gmra.mrb[0].mxu0 %v114
    %v184 = vpop.f32.mrb[0].mxu0
    %v185 = vadd.f32 0.0, %v184
    %v186 = vpop.f32.mrb[0].mxu0
    %187 = vdwg.mxu0
    %189 = vrot.lane.b32.xlu0 %v107, 120
    %v190 = vpop.permute.xlu0 %189
    %v191 = vsel %vm113, %v107, 0
    %v193 = vsel %vm113, %v190, 0
    %195 = vmatprep.subr.mxu0 0.0
    %196 = vmatpush1.xpose.msra.mxu0 %v193
    %197 = vmatprep.subr.mxu0 0.0
    %198 = vmatpush1.xpose.msra.mxu0 0.0
    %199 = vmatprep.subr.mxu0 0.0
    %200 = vmatpush1.xpose.msra.mxu0 0.0
    %201 = vmatprep.subr.mxu0 0.0
    %202 = vmatpush1.xpose.msra.mxu0 0.0
    %203 = vmatprep.subr.mxu0 0.0
    %204 = vmatpush1.xpose.msra.mxu0 0.0
    %205 = vmatprep.subr.mxu0 0.0
    %206 = vmatpush1.xpose.msra.mxu0 0.0
    %207 = vmatprep.subr.mxu0 0.0
    %208 = vmatpush1.xpose.msra.mxu0 0.0
    %209 = vmatprep.subr.mxu0 0.0
    %210 = vmatpush1.xpose.msra.mxu0 0.0
    %211 = vmatprep.subr.mxu0 0.0
    %212 = vmatpush1.xpose.msra.mxu0 0.0
    %213 = vmatprep.subr.mxu0 0.0
    %214 = vmatpush1.xpose.msra.mxu0 0.0
    %215 = vmatprep.subr.mxu0 0.0
    %216 = vmatpush1.xpose.msra.mxu0 0.0
    %217 = vmatprep.subr.mxu0 0.0
    %218 = vmatpush1.xpose.msra.mxu0 0.0
    %219 = vmatprep.subr.mxu0 0.0
    %220 = vmatpush1.xpose.msra.mxu0 0.0
    %221 = vmatprep.subr.mxu0 0.0
    %222 = vmatpush1.xpose.msra.mxu0 0.0
    %223 = vmatprep.subr.mxu0 0.0
    %224 = vmatpush1.xpose.msra.mxu0 0.0
    %225 = vmatprep.subr.mxu0 0.0
    %226 = vmatpush1.xpose.msra.mxu0 0.0
    %227 = vmatprep.subr.mxu0 0.0
    %228 = vmatpush1.xpose.msra.mxu0 0.0
    %229 = vmatprep.subr.mxu0 0.0
    %230 = vmatpush1.xpose.msra.mxu0 0.0
    %231 = vmatprep.subr.mxu0 0.0
    %232 = vmatpush1.xpose.msra.mxu0 0.0
    %233 = vmatprep.subr.mxu0 0.0
    %234 = vmatpush1.xpose.msra.mxu0 0.0
    %235 = vmatprep.subr.mxu0 0.0
    %236 = vmatpush1.xpose.msra.mxu0 0.0
    %237 = vmatprep.subr.mxu0 0.0
    %238 = vmatpush1.xpose.msra.mxu0 0.0
    %239 = vmatprep.subr.mxu0 0.0
    %240 = vmatpush1.xpose.msra.mxu0 0.0
    %241 = vmatprep.subr.mxu0 0.0
    %242 = vmatpush1.xpose.msra.mxu0 0.0
    %243 = vmatprep.subr.mxu0 0.0
    %244 = vmatpush1.xpose.msra.mxu0 0.0
    %245 = vmatprep.subr.mxu0 0.0
    %246 = vmatpush1.xpose.msra.mxu0 0.0
    %247 = vmatprep.subr.mxu0 0.0
    %248 = vmatpush1.xpose.msra.mxu0 0.0
    %249 = vmatprep.subr.mxu0 0.0
    %250 = vmatpush1.xpose.msra.mxu0 0.0
    %251 = vmatprep.subr.mxu0 0.0
    %252 = vmatpush1.xpose.msra.mxu0 0.0
    %253 = vmatprep.subr.mxu0 0.0
    %254 = vmatpush1.xpose.msra.mxu0 0.0
    %255 = vmatprep.subr.mxu0 0.0
    %256 = vmatpush1.xpose.msra.mxu0 0.0
    %257 = vmatprep.subr.mxu0 0.0
    %258 = vmatpush1.xpose.msra.mxu0 0.0
    %259 = vmatprep.mubr.f32.mxu0 0.0
    %260 = vmatmul.mubr.f32.gmra.mrb[0].mxu0 %v191
    %v261 = vpop.f32.mrb[0].mxu0
    %v262 = vadd.f32 0.0, %v261
    %v263 = vpop.f32.mrb[0].mxu0
    %264 = vdwg.mxu0
    %v265 = vrcp.pop 2.828427
    %v266 = vmul.f32 %v185, %v265
    %v267 = vmul.f32 %v262, %v265
    %v268 = vfloor.f32 %v266
    %v269 = vfloor.f32 %v267
    %v270 = vlaneseq
    %v271 = vshrl.u32 %v270, 7
    %v272 = vlaneseq
    %v273 = vand.u32 %v272, 127
    %vm274 = vcmp.gt.s32.totalorder %v273, %v271
    %v275 = vsel %vm274, 1, 0
    %vm276 = vcmp.eq.s32.totalorder %v275, 1
    %v277 = vsel %vm276, -1e+30, %v268
    %v278 = vsel %vm276, -1e+30, %v269
    %v279 = vsel %vm113, %v277, -inf
    %280 = vmax.xlane.f32.xlu0 %v279
    %v281 = vpop.xlane.xlu0 %280
    %v282 = vsel %vm113, %v278, -inf
    %283 = vmax.xlane.f32.xlu0 %v282
    %v284 = vpop.xlane.xlu0 %283
    %v285 = vsub.f32 %v277, %v281
    %v286 = vsub.f32 %v278, %v284
    %v287 = vmul.f32 %v285, 1.442695
    %v288 = vpow.pop %v287
    %v289 = vmul.f32 %v286, 1.442695
    %v290 = vpow.pop %v289
    %v291 = vsel %vm113, %v288, 0.0
    %292 = vadd.xlane.f32.xlu0 %v291
    %v293 = vpop.xlane.xlu0 %292
    %v294 = vsel %vm113, %v290, 0.0
    %295 = vadd.xlane.f32.xlu0 %v294
    %v296 = vpop.xlane.xlu0 %295
    %v297 = vrcp.pop %v293
    %v298 = vrcp.pop %v296
    %v299 = vmul.f32 %v288, %v297
    %v300 = vmul.f32 %v290, %v298
    %301 = vrot.lane.b32.xlu0 %v102, 112
    %v302 = vpop.permute.xlu0 %301
    %v305 = vsel %vm113, %v299, 0
    %307 = vmatprep.subr.mxu0 0.0
    %308 = vmatpush1.msra.mxu0 %v302
    %309 = vmatprep.subr.mxu0 0.0
    %310 = vmatpush1.msra.mxu0 0.0
    %311 = vmatprep.subr.mxu0 0.0
    %312 = vmatpush1.msra.mxu0 0.0
    %313 = vmatprep.subr.mxu0 0.0
    %314 = vmatpush1.msra.mxu0 0.0
    %315 = vmatprep.subr.mxu0 0.0
    %316 = vmatpush1.msra.mxu0 0.0
    %317 = vmatprep.subr.mxu0 0.0
    %318 = vmatpush1.msra.mxu0 0.0
    %319 = vmatprep.subr.mxu0 0.0
    %320 = vmatpush1.msra.mxu0 0.0
    %321 = vmatprep.subr.mxu0 0.0
    %322 = vmatpush1.msra.mxu0 0.0
    %323 = vmatprep.subr.mxu0 0.0
    %324 = vmatpush1.msra.mxu0 0.0
    %325 = vmatprep.subr.mxu0 0.0
    %326 = vmatpush1.msra.mxu0 0.0
    %327 = vmatprep.subr.mxu0 0.0
    %328 = vmatpush1.msra.mxu0 0.0
    %329 = vmatprep.subr.mxu0 0.0
    %330 = vmatpush1.msra.mxu0 0.0
    %331 = vmatprep.subr.mxu0 0.0
    %332 = vmatpush1.msra.mxu0 0.0
    %333 = vmatprep.subr.mxu0 0.0
    %334 = vmatpush1.msra.mxu0 0.0
    %335 = vmatprep.subr.mxu0 0.0
    %336 = vmatpush1.msra.mxu0 0.0
    %337 = vmatprep.subr.mxu0 0.0
    %338 = vmatpush1.msra.mxu0 0.0
    %339 = vmatprep.subr.mxu0 0.0
    %340 = vmatpush1.msra.mxu0 0.0
    %341 = vmatprep.subr.mxu0 0.0
    %342 = vmatpush1.msra.mxu0 0.0
    %343 = vmatprep.subr.mxu0 0.0
    %344 = vmatpush1.msra.mxu0 0.0
    %345 = vmatprep.subr.mxu0 0.0
    %346 = vmatpush1.msra.mxu0 0.0
    %347 = vmatprep.subr.mxu0 0.0
    %348 = vmatpush1.msra.mxu0 0.0
    %349 = vmatprep.subr.mxu0 0.0
    %350 = vmatpush1.msra.mxu0 0.0
    %351 = vmatprep.subr.mxu0 0.0
    %352 = vmatpush1.msra.mxu0 0.0
    %353 = vmatprep.subr.mxu0 0.0
    %354 = vmatpush1.msra.mxu0 0.0
    %355 = vmatprep.subr.mxu0 0.0
    %356 = vmatpush1.msra.mxu0 0.0
    %357 = vmatprep.subr.mxu0 0.0
    %358 = vmatpush1.msra.mxu0 0.0
    %359 = vmatprep.subr.mxu0 0.0
    %360 = vmatpush1.msra.mxu0 0.0
    %361 = vmatprep.subr.mxu0 0.0
    %362 = vmatpush1.msra.mxu0 0.0
    %363 = vmatprep.subr.mxu0 0.0
    %364 = vmatpush1.msra.mxu0 0.0
    %365 = vmatprep.subr.mxu0 0.0
    %366 = vmatpush1.msra.mxu0 0.0
    %367 = vmatprep.subr.mxu0 0.0
    %368 = vmatpush1.msra.mxu0 0.0
    %369 = vmatprep.subr.mxu0 0.0
    %370 = vmatpush1.msra.mxu0 0.0
    %371 = vmatprep.mubr.f32.mxu0 0.0
    %372 = vmatmul.mubr.f32.gmra.mrb[0].mxu0 %v305
    %v373 = vpop.f32.mrb[0].mxu0
    %v374 = vadd.f32 0.0, %v373
    %v375 = vpop.f32.mrb[0].mxu0
    %376 = vdwg.mxu0
    %377 = vrot.lane.b32.xlu0 %v107, 112
    %v378 = vpop.permute.xlu0 %377
    %v381 = vsel %vm113, %v300, 0
    %383 = vmatprep.subr.mxu0 0.0
    %384 = vmatpush1.msra.mxu0 %v378
    %385 = vmatprep.subr.mxu0 0.0
    %386 = vmatpush1.msra.mxu0 0.0
    %387 = vmatprep.subr.mxu0 0.0
    %388 = vmatpush1.msra.mxu0 0.0
    %389 = vmatprep.subr.mxu0 0.0
    %390 = vmatpush1.msra.mxu0 0.0
    %391 = vmatprep.subr.mxu0 0.0
    %392 = vmatpush1.msra.mxu0 0.0
    %393 = vmatprep.subr.mxu0 0.0
    %394 = vmatpush1.msra.mxu0 0.0
    %395 = vmatprep.subr.mxu0 0.0
    %396 = vmatpush1.msra.mxu0 0.0
    %397 = vmatprep.subr.mxu0 0.0
    %398 = vmatpush1.msra.mxu0 0.0
    %399 = vmatprep.subr.mxu0 0.0
    %400 = vmatpush1.msra.mxu0 0.0
    %401 = vmatprep.subr.mxu0 0.0
    %402 = vmatpush1.msra.mxu0 0.0
    %403 = vmatprep.subr.mxu0 0.0
    %404 = vmatpush1.msra.mxu0 0.0
    %405 = vmatprep.subr.mxu0 0.0
    %406 = vmatpush1.msra.mxu0 0.0
    %407 = vmatprep.subr.mxu0 0.0
    %408 = vmatpush1.msra.mxu0 0.0
    %409 = vmatprep.subr.mxu0 0.0
    %410 = vmatpush1.msra.mxu0 0.0
    %411 = vmatprep.subr.mxu0 0.0
    %412 = vmatpush1.msra.mxu0 0.0
    %413 = vmatprep.subr.mxu0 0.0
    %414 = vmatpush1.msra.mxu0 0.0
    %415 = vmatprep.subr.mxu0 0.0
    %416 = vmatpush1.msra.mxu0 0.0
    %417 = vmatprep.subr.mxu0 0.0
    %418 = vmatpush1.msra.mxu0 0.0
    %419 = vmatprep.subr.mxu0 0.0
    %420 = vmatpush1.msra.mxu0 0.0
    %421 = vmatprep.subr.mxu0 0.0
    %422 = vmatpush1.msra.mxu0 0.0
    %423 = vmatprep.subr.mxu0 0.0
    %424 = vmatpush1.msra.mxu0 0.0
    %425 = vmatprep.subr.mxu0 0.0
    %426 = vmatpush1.msra.mxu0 0.0
    %427 = vmatprep.subr.mxu0 0.0
    %428 = vmatpush1.msra.mxu0 0.0
    %429 = vmatprep.subr.mxu0 0.0
    %430 = vmatpush1.msra.mxu0 0.0
    %431 = vmatprep.subr.mxu0 0.0
    %432 = vmatpush1.msra.mxu0 0.0
    %433 = vmatprep.subr.mxu0 0.0
    %434 = vmatpush1.msra.mxu0 0.0
    %435 = vmatprep.subr.mxu0 0.0
    %436 = vmatpush1.msra.mxu0 0.0
    %437 = vmatprep.subr.mxu0 0.0
    %438 = vmatpush1.msra.mxu0 0.0
    %439 = vmatprep.subr.mxu0 0.0
    %440 = vmatpush1.msra.mxu0 0.0
    %441 = vmatprep.subr.mxu0 0.0
    %442 = vmatpush1.msra.mxu0 0.0
    %443 = vmatprep.subr.mxu0 0.0
    %444 = vmatpush1.msra.mxu0 0.0
    %445 = vmatprep.subr.mxu0 0.0
    %446 = vmatpush1.msra.mxu0 0.0
    %447 = vmatprep.mubr.f32.mxu0 0.0
    %448 = vmatmul.mubr.f32.gmra.mrb[0].mxu0 %v381
    %v449 = vpop.f32.mrb[0].mxu0
    %v450 = vadd.f32 0.0, %v449
    %v451 = vpop.f32.mrb[0].mxu0
    %452 = vdwg.mxu0
    %453 = vst.msk [vmem:[#allocation2] sm:$0xff] %vm113, %v374
    %454 = vst.msk [vmem:[#allocation2 + $0x8] sm:$0xff] %vm113, %v450
    // Predicated region
    $region14: #{tpu_custom_call.1} parent=1 // pred_check
      _
    $region15: #{tpu_custom_call.1} parent=1 // pred_check_branch
      %456 = sbr.rel (0) target = $region17
    $region16: #{tpu_custom_call.1} parent=1 // pred_region
      %s458 = ssub.s32 256, 256
      %459 = vsyncadd [#allocation3], %s458
      %s460 = sshll.u32 [#allocation2], 4
      %s461 = int_to_ptr.vmem [resolvable:$true] %s460
      %466 = dma.vmem_to_hbm [thread:$0]  %s461, 256, %s3, [#allocation3], 128, 128, 8
    $region17: #{tpu_custom_call.1} parent=1 // pred_fallthru
      _
    // Predicated region
    $region18: #{tpu_custom_call.1} parent=1 // pred_check
      _
    $region19: #{tpu_custom_call.1} parent=1 // pred_check_branch
      %468 = sbr.rel (0) target = $region21
    $region20: #{tpu_custom_call.1} parent=1 // pred_region
      %469 = dma.done [#allocation3], 256
    $region21: #{tpu_custom_call.1} parent=1 // pred_fallthru
      _
    %470 = vsyncpa [#allocation3], 1

</llo_original>
